<compile_context>
chip_gen: v7x
topology: tpu7x:2x2x1
jax: 0.10.0
libtpu: 0.0.40
codegen_flags: <defaults>
</compile_context>

<pallas_src>
import math

import jax
import jax.numpy as jnp
from jax import lax
from jax.experimental import pallas as pl
from jax.experimental.pallas import tpu as pltpu


def _round_up(x, m):
    return ((x + m - 1) // m) * m


def _pick_tile(n, target):
    """Rows per tile: multiple of 16, prefer an exact divisor of n near target."""
    target = max(16, (target // 16) * 16)
    if n <= target:
        return _round_up(n, 16)
    best = None
    for tm in range(target, 15, -16):
        if n % tm == 0:
            best = tm
            break
    if best is not None and best * 2 >= target:
        return best            # exact divisor, no padded/garbage rows
    return target              # fall back to padding (< target wasted rows / batch)


def _const_spec(shape):
    """BlockSpec for a grid-constant operand; single-buffered when supported."""
    idx = lambda bi, ri: (0,) * len(shape)
    try:
        return pl.BlockSpec(shape, idx, pipeline_mode=pl.Buffered(1))
    except Exception:   # older jax without pipeline_mode / Buffered
        return pl.BlockSpec(shape, idx)


def merge_block_forward(x, params, resolution):
    """x: (B, H*W, Cin) with H = 2*resolution[0], W = 2*resolution[1].

    Returns (B, (H/2)*(W/2), Cout) in bfloat16.
    """
    B, new_HW, Cin = x.shape
    H, W = resolution[0] * 2, resolution[1] * 2
    assert new_HW == H * W, "error size"
    assert H % 2 == 0 and W % 2 == 0, "Merge_Block requires even H and W"

    w = params["conv_w"]            # (Cout, Cin, 3, 3)
    bias = params["conv_b"]         # (Cout,)
    gamma, beta = params["bn_gamma"], params["bn_beta"]
    mean, var, eps = params["bn_mean"], params["bn_var"], params["bn_eps"]

    Cout = w.shape[0]
    Hout, Wout = H // 2, W // 2
    N = Hout * Wout
    K9 = 9 * Cin

    # ---- lane-dense output channels only when it does not force an un-pad copy ----
    if Cout % 128 == 0 or Cout < 128:
        Cout_p = Cout               # full-dim block (masked stores only if <128)
    else:
        Cout_p = _round_up(Cout, 128)

    # ---- per-generation VMEM budget -> row tile ----
    try:
        vmem_cap = int(pltpu.get_tpu_info().vmem_capacity_bytes)
    except Exception:
        vmem_cap = 64 * 2**20       # be v7x-safe if the query is unavailable
    budget = min(vmem_cap // 4, 32 * 2**20)

    fixed_bytes = K9 * Cout_p * 2 + Cout_p * 4              # weights + shift
    per_row_bytes = 2 * (K9 * 2) + 2 * (Cout_p * 2)         # dbl-buf taps + out (bf16)
    target_rows = int(max(16, min(1024, (budget - fixed_bytes) // max(per_row_bytes, 1))))
    TM = _pick_tile(N, target_rows)
    N_pad = _round_up(N, TM)
    R = N_pad // TM

    # ---- XLA glue: (B,HW,C) -> padded NHWC -> stride-2 im2col taps (B, N, 9*Cin), bf16 ----
    x_nhwc = x.reshape(B, H, W, Cin).astype(jnp.bfloat16)    # HW index is h*W + w
    x_pad = jnp.pad(x_nhwc, ((0, 0), (1, 1), (1, 1), (0, 0)))
    cols = []
    for kh in range(3):
        rows = x_pad[:, kh: kh + 2 * Hout: 2]                # (B, Hout, W+2, Cin)
        for kw in range(3):
            cols.append(rows[:, :, kw: kw + 2 * Wout: 2, :]) # (B, Hout, Wout, Cin)
    taps = jnp.stack(cols, axis=3).reshape(B, N, K9)         # tap order: (kh*3+kw, cin)
    if N_pad != N:
        taps = jnp.pad(taps, ((0, 0), (0, N_pad - N), (0, 0)))

    # ---- weights: fold BN scale (f32) then cast bf16; layout (9*Cin, Cout_p) ----
    inv_std = 1.0 / jnp.sqrt(var.astype(jnp.float32) + eps)
    ch_scale = (gamma.astype(jnp.float32) * inv_std)                       # (Cout,)
    shift = ((bias.astype(jnp.float32) - mean.astype(jnp.float32)) * ch_scale
             + beta.astype(jnp.float32))                                    # (Cout,)
    w_f = jnp.transpose(w, (2, 3, 1, 0)).reshape(K9, Cout).astype(jnp.float32)
    w_f = w_f * ch_scale[None, :]
    w_k = jnp.pad(w_f, ((0, 0), (0, Cout_p - Cout))).astype(jnp.bfloat16)
    shift_p = jnp.pad(shift, (0, Cout_p - Cout)).reshape(1, Cout_p)

    inv_sqrt2 = 1.0 / math.sqrt(2.0)

    def kernel(tap_ref, w_ref, shift_ref, o_ref):
        # Single MXU dot per tile: (TM, 9*Cin) @ (9*Cin, Cout_p), f32 accumulation
        # in registers; no VMEM accumulator round trips.
        acc = jnp.dot(tap_ref[0], w_ref[...], preferred_element_type=jnp.float32)
        y = acc + shift_ref[...]                 # BN scale already folded into weights
        y = 0.5 * y * (1.0 + lax.erf(y * inv_sqrt2))   # exact GELU (PyTorch nn.GELU)
        o_ref[0] = y.astype(o_ref.dtype)

    # ---- cost estimate & VMEM budget ----
    flops = 2 * B * N_pad * K9 * Cout_p
    bytes_accessed = (taps.size * 2 + w_k.size * 2 + shift_p.size * 4
                      + B * N_pad * Cout_p * 2)
    cost = pl.CostEstimate(flops=flops, transcendentals=B * N_pad * Cout_p,
                           bytes_accessed=bytes_accessed)
    est_vmem = (2 * TM * K9 * 2          # tap tile, double-buffered, bf16
                + 2 * K9 * Cout_p * 2    # weights (headroom even if double-buffered)
                + 2 * Cout_p * 4         # shift
                + 2 * TM * Cout_p * 2)   # output tile, double-buffered, bf16
    vmem_limit = int(min(40 * 2**20, max(16 * 2**20, 2 * est_vmem)))

    out_full = pl.pallas_call(
        kernel,
        out_shape=jax.ShapeDtypeStruct((B, N_pad, Cout_p), jnp.bfloat16),
        grid_spec=pltpu.PrefetchScalarGridSpec(
            num_scalar_prefetch=0,
            grid=(B, R),
            in_specs=[
                pl.BlockSpec((1, TM, K9), lambda bi, ri: (bi, ri, 0)),
                _const_spec((K9, Cout_p)),
                _const_spec((1, Cout_p)),
            ],
            out_specs=pl.BlockSpec((1, TM, Cout_p), lambda bi, ri: (bi, ri, 0)),
        ),
        compiler_params=pltpu.CompilerParams(
            dimension_semantics=("parallel", "parallel"),
            vmem_limit_bytes=vmem_limit),
        cost_estimate=cost,
    )(taps, w_k, shift_p)

    if N_pad != N or Cout_p != Cout:
        # Only reached when no divisor row tile exists or Cout needs lane padding;
        # otherwise the kernel output is returned as-is (no extra copy).
        out_full = out_full[:, :N, :Cout]
    return out_full


def _reference_forward(x, params, resolution):
    """Pure-JAX f32 reference (lax.conv) for correctness checking."""
    B, new_HW, C = x.shape
    H, W = resolution[0] * 2, resolution[1] * 2
    x_nchw = jnp.transpose(x, (0, 2, 1)).reshape(B, C, H, W)
    y = lax.conv_general_dilated(
        x_nchw, params["conv_w"], window_strides=(2, 2), padding=((1, 1), (1, 1)),
        dimension_numbers=("NCHW", "OIHW", "NCHW"))
    y = y + params["conv_b"][None, :, None, None]
    inv_std = 1.0 / jnp.sqrt(params["bn_var"] + params["bn_eps"])
    y = (y - params["bn_mean"][None, :, None, None]) \
        * (params["bn_gamma"] * inv_std)[None, :, None, None] \
        + params["bn_beta"][None, :, None, None]
    y = 0.5 * y * (1.0 + lax.erf(y / math.sqrt(2.0)))
    Bo, Co = y.shape[:2]
    return jnp.transpose(y.reshape(Bo, Co, -1), (0, 2, 1))


if __name__ == "__main__":
    key = jax.random.PRNGKey(0)
    k_x, k_w, k_b, k_g, k_be, k_m, k_v = jax.random.split(key, 7)

    # Small shapes consistent with the module: resolution=(4,4) -> H=W=8,
    # dim (Cin)=4, dim_out (Cout)=8, batch=2.  Input x: (B, H*W, Cin) = (2, 64, 4).
    resolution = (4, 4)
    B, Cin, Cout = 2, 4, 8
    H, W = resolution[0] * 2, resolution[1] * 2

    x = jax.random.normal(k_x, (B, H * W, Cin), dtype=jnp.float32)

    params = {
        "conv_w": 0.1 * jax.random.normal(k_w, (Cout, Cin, 3, 3), dtype=jnp.float32),
        "conv_b": 0.05 * jax.random.normal(k_b, (Cout,), dtype=jnp.float32),
        "bn_gamma": 1.0 + 0.1 * jax.random.normal(k_g, (Cout,), dtype=jnp.float32),
        "bn_beta": 0.1 * jax.random.normal(k_be, (Cout,), dtype=jnp.float32),
        "bn_mean": 0.1 * jax.random.normal(k_m, (Cout,), dtype=jnp.float32),
        "bn_var": jnp.abs(1.0 + 0.1 * jax.random.normal(k_v, (Cout,), dtype=jnp.float32)),
        "bn_eps": 1e-5,
    }

    out = merge_block_forward(x, params, resolution)
    out = jax.block_until_ready(out)

    ref = _reference_forward(x, params, resolution)
    assert out.shape == (B, (H // 2) * (W // 2), Cout), out.shape
    # bf16 taps/weights/output with f32 accumulation -> relaxed tolerance vs f32 reference.
    err = jnp.max(jnp.abs(out.astype(jnp.float32) - ref))
    assert jnp.allclose(out.astype(jnp.float32), ref, rtol=2e-2, atol=2e-2), float(err)

    print("KERNEL_OK")
</pallas_src>

<mosaic_0001>
module attributes {stable_mosaic.version = 11 : i64} {
  func.func @kernel(%arg0: i32, %arg1: i32, %arg2: memref<1x16x36xbf16, #tpu.memory_space<vmem>>, %arg3: memref<36x8xbf16, #tpu.memory_space<vmem>>, %arg4: memref<1x8xf32, #tpu.memory_space<vmem>>, %arg5: memref<1x16x8xbf16, #tpu.memory_space<vmem>>) attributes {dimension_semantics = [#tpu.dimension_semantics<parallel>, #tpu.dimension_semantics<parallel>], iteration_bounds = array<i64: 2, 1>, scalar_prefetch = 0 : i64, scratch_operands = 0 : i64, tpu.core_type = #tpu.core_type<tc>, window_params = [{transform_indices = @transform_0, window_bounds = array<i64: 1, 16, 36>}, {pipeline_mode = #tpu.pipeline_mode<synchronous>, transform_indices = @transform_1, window_bounds = array<i64: 36, 8>}, {pipeline_mode = #tpu.pipeline_mode<synchronous>, transform_indices = @transform_2, window_bounds = array<i64: 1, 8>}, {transform_indices = @transform_3, window_bounds = array<i64: 1, 16, 8>}]} {
    %c0 = arith.constant 0 : index
    %c0_0 = arith.constant 0 : index
    %c0_1 = arith.constant 0 : index
    %0 = vector.load %arg2[%c0, %c0_0, %c0_1] : memref<1x16x36xbf16, #tpu.memory_space<vmem>>, vector<1x16x36xbf16>
    %1 = vector.shape_cast %0 : vector<1x16x36xbf16> to vector<16x36xbf16>
    %c0_2 = arith.constant 0 : index
    %c0_3 = arith.constant 0 : index
    %2 = vector.load %arg3[%c0_2, %c0_3] : memref<36x8xbf16, #tpu.memory_space<vmem>>, vector<36x8xbf16>
    %cst = arith.constant dense<0.000000e+00> : vector<16x8xf32>
    %3 = tpu.matmul %1, %2, %cst {dimension_numbers = #tpu.dot_dimension_numbers<[1], [0], [0], [1], [0, 0, 1, 1], [], []>} : vector<16x36xbf16>, vector<36x8xbf16>, vector<16x8xf32> -> vector<16x8xf32>
    %c0_4 = arith.constant 0 : index
    %c0_5 = arith.constant 0 : index
    %4 = vector.load %arg4[%c0_4, %c0_5] : memref<1x8xf32, #tpu.memory_space<vmem>>, vector<1x8xf32>
    %5 = vector.broadcast %4 : vector<1x8xf32> to vector<16x8xf32>
    %6 = arith.addf %3, %5 : vector<16x8xf32>
    %cst_6 = arith.constant 5.000000e-01 : f32
    %7 = vector.broadcast %cst_6 : f32 to vector<16x8xf32>
    %8 = arith.mulf %7, %6 : vector<16x8xf32>
    %cst_7 = arith.constant 0.707106769 : f32
    %9 = vector.broadcast %cst_7 : f32 to vector<16x8xf32>
    %10 = arith.mulf %6, %9 : vector<16x8xf32>
    %11 = math.erf %10 : vector<16x8xf32>
    %cst_8 = arith.constant 1.000000e+00 : f32
    %12 = vector.broadcast %cst_8 : f32 to vector<16x8xf32>
    %13 = arith.addf %12, %11 : vector<16x8xf32>
    %14 = arith.mulf %8, %13 : vector<16x8xf32>
    %15 = arith.truncf %14 : vector<16x8xf32> to vector<16x8xbf16>
    %c0_9 = arith.constant 0 : index
    %c0_10 = arith.constant 0 : index
    %c0_11 = arith.constant 0 : index
    %16 = vector.load %arg5[%c0_9, %c0_10, %c0_11] : memref<1x16x8xbf16, #tpu.memory_space<vmem>>, vector<1x16x8xbf16>
    %17 = vector.shape_cast %16 : vector<1x16x8xbf16> to vector<16x8xbf16>
    %18 = vector.shape_cast %15 : vector<16x8xbf16> to vector<1x16x8xbf16>
    tpu.vector_store %arg5[%c0_9, %c0_10, %c0_11], %18 {strides = array<i32>} : memref<1x16x8xbf16, #tpu.memory_space<vmem>>, vector<1x16x8xbf16>,
    return
  }
  func.func @transform_0(%arg0: i32, %arg1: i32) -> (i32, i32, i32) {
    %c0_i32 = arith.constant 0 : i32
    %c0_i32_0 = arith.constant 0 : i32
    return %arg0, %arg1, %c0_i32 : i32, i32, i32
  }
  func.func @transform_1(%arg0: i32, %arg1: i32) -> (i32, i32) {
    %c0_i32 = arith.constant 0 : i32
    %c0_i32_0 = arith.constant 0 : i32
    %c0_i32_1 = arith.constant 0 : i32
    return %c0_i32, %c0_i32_0 : i32, i32
  }
  func.func @transform_2(%arg0: i32, %arg1: i32) -> (i32, i32) {
    %c0_i32 = arith.constant 0 : i32
    %c0_i32_0 = arith.constant 0 : i32
    %c0_i32_1 = arith.constant 0 : i32
    return %c0_i32, %c0_i32_0 : i32, i32
  }
  func.func @transform_3(%arg0: i32, %arg1: i32) -> (i32, i32, i32) {
    %c0_i32 = arith.constant 0 : i32
    %c0_i32_0 = arith.constant 0 : i32
    return %arg0, %arg1, %c0_i32 : i32, i32, i32
  }
}

</mosaic_0001>

<llo_original>
// kernel: tpu_custom_call.1
$region0: #{tpu_custom_call.1}
  #allocation0 [shape = 'u32[]', space=smem, size = 0x4, offset = 0x4, fixed_abs, tag = 'smem constant byte address 0x4 - core index']
  #allocation1 [shape = 'u32[144,128]{1,0:T(1,128)}', space=vmem, size = 0x12000, scoped, tag = 'internal scratch']
  %s0 = inlined_call_operand.vmem [shape: bf16[2,16,36], index: 0, kind: input, shape index: {}]
  %s1 = inlined_call_operand.vmem [shape: bf16[36,8], index: 1, kind: input, shape index: {}]
  %s2 = inlined_call_operand.vmem [shape: f32[1,8], index: 2, kind: input, shape index: {}]
  %s3 = inlined_call_operand.vmem [shape: bf16[2,16,8], index: 3, kind: output, shape index: {}]
  %s4 = sld [smem:[#allocation0]]
  $region45: #{tpu_custom_call.1} parent=0
    _
  %s6 = ssub.s32 1, %s4
  %s7 = scalar_select 0, %s6, %s4
  loop: start=0, step=1, limit=4
  $region2: #{tpu_custom_call.1} parent=0 // loop_pre_header
    _
  $region3: #{tpu_custom_call.1} parent=0 // loop_header
    %s9 = sphi 0, %s13
    %p10 = scmp.ge.s32.totalorder %s9, 4
    %s16 = sphi 0, %s28
    %s17 = sphi 0, %s24
    %s18 = sphi 0, %s16
    %s19 = sphi 0, %s17
    %s20 = sphi 0, %s18
    %s21 = sphi 0, %s19
    %s33 = sphi 0, %s35
    %s36 = sphi 0, %s33
    %s37 = sphi 0, %s36
    %s53 = sphi 0, %s37
    %s57 = sphi 0, %s57
    %s59 = sphi 0, %s57
    %s60 = sphi 0, %s59
    %s74 = sphi 0, %s60
    %s78 = sphi 0, %s78
    %s80 = sphi 0, %s78
    %s81 = sphi 0, %s80
    %s95 = sphi 0, %s81
    %s103 = sphi 0, %s105
    %s106 = sphi 0, %s103
    %s107 = sphi 0, %s106
    %s123 = sphi 0, %s107
  $region4: #{tpu_custom_call.1} parent=0 // loop_header_branch
    %12 = sbr.rel (%p10) target = $region8
  $region5: #{tpu_custom_call.1} parent=0 // loop_body
    %s14 = ssub.s32 %s9, 1
    %s15 = ssub.s32 %s9, 2
    %s22 = sadd.s32 1, %s17
    %p23 = scmp.ge.s32.totalorder %s22, 1
    %s24 = scalar_select %p23, 0, %s22
    %s25 = sadd.s32 1, %s16
    %s26 = scalar_select %p23, %s25, %s16
    %p27 = scmp.ge.s32.totalorder %s26, 2
    %s28 = scalar_select %p27, 0, %s26
    %s29 = ssub.s32 %s16, %s28
    %s30 = ssub.s32 %s17, %s24
    %s31 = sor.u32 %s29, %s30
    %p32 = scmp.eq.s32.totalorder %s31, 0
    %s34 = sadd.s32 %s33, 1
    %s35 = scalar_select %p32, %s33, %s34
    %p38 = pneg %p32
    %p39 = scmp.eq.s32.totalorder %s9, 1
    %p40 = por %p38, %p39
    %p41 = scmp.ne.s32.totalorder %s33, %s36
    %p42 = scmp.eq.s32.totalorder %s9, 0
    %p43 = por %p41, %p42
    %p44 = scmp.ne.s32.totalorder %s33, %s36
    %p45 = scmp.eq.s32.totalorder %s14, 1
    %p46 = por %p44, %p45
    %p47 = scmp.ne.s32.totalorder %s36, %s37
    %p48 = scmp.eq.s32.totalorder %s14, 0
    %p49 = por %p47, %p48
    %p50 = scmp.ne.s32.totalorder %s36, %s37
    %p51 = scmp.eq.s32.totalorder %s15, 1
    %p52 = por %p50, %p51
    %p54 = scmp.ne.s32.totalorder %s37, %s53
    %p55 = scmp.eq.s32.totalorder %s15, 0
    %p56 = por %p54, %p55
    %s58 = sadd.s32 %s57, 1
    %p61 = scmp.eq.s32.totalorder %s9, 1
    %p62 = scmp.ne.s32.totalorder %s57, %s59
    %p63 = scmp.eq.s32.totalorder %s9, 0
    %p64 = por %p62, %p63
    %p65 = scmp.ne.s32.totalorder %s57, %s59
    %p66 = scmp.eq.s32.totalorder %s14, 1
    %p67 = por %p65, %p66
    %p68 = scmp.ne.s32.totalorder %s59, %s60
    %p69 = scmp.eq.s32.totalorder %s14, 0
    %p70 = por %p68, %p69
    %p71 = scmp.ne.s32.totalorder %s59, %s60
    %p72 = scmp.eq.s32.totalorder %s15, 1
    %p73 = por %p71, %p72
    %p75 = scmp.ne.s32.totalorder %s60, %s74
    %p76 = scmp.eq.s32.totalorder %s15, 0
    %p77 = por %p75, %p76
    %s79 = sadd.s32 %s78, 1
    %p82 = scmp.eq.s32.totalorder %s9, 1
    %p83 = scmp.ne.s32.totalorder %s78, %s80
    %p84 = scmp.eq.s32.totalorder %s9, 0
    %p85 = por %p83, %p84
    %p86 = scmp.ne.s32.totalorder %s78, %s80
    %p87 = scmp.eq.s32.totalorder %s14, 1
    %p88 = por %p86, %p87
    %p89 = scmp.ne.s32.totalorder %s80, %s81
    %p90 = scmp.eq.s32.totalorder %s14, 0
    %p91 = por %p89, %p90
    %p92 = scmp.ne.s32.totalorder %s80, %s81
    %p93 = scmp.eq.s32.totalorder %s15, 1
    %p94 = por %p92, %p93
    %p96 = scmp.ne.s32.totalorder %s81, %s95
    %p97 = scmp.eq.s32.totalorder %s15, 0
    %p98 = por %p96, %p97
    %s99 = ssub.s32 %s16, %s28
    %s100 = ssub.s32 %s17, %s24
    %s101 = sor.u32 %s99, %s100
    %p102 = scmp.eq.s32.totalorder %s101, 0
    %s104 = sadd.s32 %s103, 1
    %s105 = scalar_select %p102, %s103, %s104
    %p108 = pneg %p102
    %p109 = scmp.eq.s32.totalorder %s9, 1
    %p110 = por %p108, %p109
    %p111 = scmp.ne.s32.totalorder %s103, %s106
    %p112 = scmp.eq.s32.totalorder %s9, 0
    %p113 = por %p111, %p112
    %p114 = scmp.ne.s32.totalorder %s103, %s106
    %p115 = scmp.eq.s32.totalorder %s14, 1
    %p116 = por %p114, %p115
    %p117 = scmp.ne.s32.totalorder %s106, %s107
    %p118 = scmp.eq.s32.totalorder %s14, 0
    %p119 = por %p117, %p118
    %p120 = scmp.ne.s32.totalorder %s106, %s107
    %p121 = scmp.eq.s32.totalorder %s15, 1
    %p122 = por %p120, %p121
    %p124 = scmp.ne.s32.totalorder %s107, %s123
    %p125 = scmp.eq.s32.totalorder %s15, 0
    %p126 = por %p124, %p125
    %p127 = scmp.le.s32.totalorder 1, %s9
    %p128 = scmp.lt.s32.totalorder %s9, 3
    %p129 = pnand %p127, %p128
    %p130 = pneg %p129
    // Predicated region
    $region9: #{tpu_custom_call.1} parent=5 // pred_check
      _
    $region10: #{tpu_custom_call.1} parent=5 // pred_check_branch
      %132 = sbr.rel (%p129) target = $region12
    $region11: #{tpu_custom_call.1} parent=5 // pred_region
      %s133 = ssub.s32 %s9, 1
      // Predicated region
      $region13: #{tpu_custom_call.1} parent=11 // pred_check
        %p134 = pneg %p70
      $region14: #{tpu_custom_call.1} parent=11 // pred_check_branch
        %136 = sbr.rel (%p134) target = $region16
      $region15: #{tpu_custom_call.1} parent=11 // pred_region
        _
      $region16: #{tpu_custom_call.1} parent=11 // pred_fallthru
        _
      // Predicated region
      $region17: #{tpu_custom_call.1} parent=11 // pred_check
        %p137 = pneg %p91
      $region18: #{tpu_custom_call.1} parent=11 // pred_check_branch
        %139 = sbr.rel (%p137) target = $region20
      $region19: #{tpu_custom_call.1} parent=11 // pred_region
        _
      $region20: #{tpu_custom_call.1} parent=11 // pred_fallthru
        _
    $region12: #{tpu_custom_call.1} parent=5 // pred_fallthru
      _
    %p140 = scmp.lt.s32.totalorder %s9, 2
    // Predicated region
    $region21: #{tpu_custom_call.1} parent=5 // pred_check
      %p141 = pneg %p140
    $region22: #{tpu_custom_call.1} parent=5 // pred_check_branch
      %143 = sbr.rel (%p141) target = $region24
    $region23: #{tpu_custom_call.1} parent=5 // pred_region
      // Predicated region
      $region25: #{tpu_custom_call.1} parent=23 // pred_check
        %p144 = pneg %p43
      $region26: #{tpu_custom_call.1} parent=23 // pred_check_branch
        %146 = sbr.rel (%p144) target = $region28
      $region27: #{tpu_custom_call.1} parent=23 // pred_region
        %s147 = smul.u32 2, %s17
        %p148 = scmp.lt.s32.totalorder %s16, 1
        %s149 = scalar_select %p148, %s16, 1
        %p150 = scmp.lt.s32.totalorder %s147, 1
        %s151 = scalar_select %p150, %s147, 1
        %s152 = smul.addr %s149, 2
        %s153 = sadd.s32 %s151, %s152
        %s154 = smul.addr %s153, 4
        %s155 = scalar_lea.vmem %s0, %s154
        %s156 = smul.u32 2, %s17
      $region28: #{tpu_custom_call.1} parent=23 // pred_fallthru
        _
    $region24: #{tpu_custom_call.1} parent=5 // pred_fallthru
      _
    %p157 = scmp.le.s32.totalorder 1, %s9
    %p158 = scmp.lt.s32.totalorder %s9, 3
    %p159 = pnand %p157, %p158
    %p160 = pneg %p159
    // Predicated region
    $region29: #{tpu_custom_call.1} parent=5 // pred_check
      _
    $region30: #{tpu_custom_call.1} parent=5 // pred_check_branch
      %162 = sbr.rel (%p159) target = $region32
    $region31: #{tpu_custom_call.1} parent=5 // pred_region
      %s163 = ssub.s32 %s9, 1
      %s164 = smul.u32 2, %s19
      %p165 = scmp.lt.s32.totalorder %s18, 1
      %s166 = scalar_select %p165, %s18, 1
      %p167 = scmp.lt.s32.totalorder %s164, 1
      %s168 = scalar_select %p167, %s164, 1
      %s169 = smul.addr %s166, 2
      %s170 = sadd.s32 %s168, %s169
      %s171 = smul.addr %s170, 4
      %s172 = scalar_lea.vmem %s0, %s171
      %p173 = pneg %p49
      %p174 = pneg %p46
      %p175 = pneg %p70
      %p176 = pneg %p67
      %p177 = pneg %p91
      %p178 = pneg %p88
      %p179 = pneg %p119
      %p180 = pneg %p116
      %s181 = smul.u32 2, %s19
      %p182 = scmp.lt.s32.totalorder %s18, 1
      %s183 = scalar_select %p182, %s18, 1
      %p184 = scmp.lt.s32.totalorder %s181, 1
      %s185 = scalar_select %p184, %s181, 1
      %s186 = smul.addr %s183, 2
      %s187 = sadd.s32 %s185, %s186
      %s188 = smul.addr %s187, 4
      %s189 = scalar_lea.vmem %s3, %s188
      %s190 = smul.u32 2, %s19
      %p191 = scmp.lt.s32.totalorder %s18, 1
      %s192 = scalar_select %p191, %s18, 1
      %p193 = scmp.lt.s32.totalorder %s190, 1
      %s194 = scalar_select %p193, %s190, 1
      %s195 = smul.addr %s192, 2
      %s196 = sadd.s32 %s194, %s195
      %s197 = smul.addr %s196, 4
      %s198 = scalar_lea.vmem %s0, %s197
      %s199 = smul.u32 2, %s19
      %s200 = smul.u32 2, %s19
      %p201 = scmp.lt.s32.totalorder %s18, 1
      %s202 = scalar_select %p201, %s18, 1
      %p203 = scmp.lt.s32.totalorder %s200, 1
      %s204 = scalar_select %p203, %s200, 1
      %s205 = smul.addr %s202, 2
      %s206 = sadd.s32 %s204, %s205
      %s207 = smul.addr %s206, 4
      %s208 = scalar_lea.vmem %s3, %s207
      %s209 = smul.u32 2, %s19
      %v211 = vld [vmem:[%s198] sm:$0xf]
      %v212 = vld [vmem:[%s198 + $0x4] sm:$0xf]
      %v213 = vld [vmem:[%s1] sm:$0xf]
      %v214 = vld [vmem:[%s1 + $0x4] sm:$0xf]
      %v215 = vld [vmem:[%s1 + $0x8] sm:$0xf]
      %v216 = vld [vmem:[%s1 + $0xc] sm:$0xf]
      %v217 = vld [vmem:[%s1 + $0x10] sm:$0x3]
      %v218 = vld [vmem:[%s2] sm:$0x1]
      %v220 = vlaneseq
      %v221 = vshrl.u32 %v220, 7
      %v222 = vsub.s32 0, %v221
      %v223 = vrot.slane %v218, %v222
      %v227 = vunpack.c.l.b16 %v211
      %v228 = vunpack.c.l.b16 %v212
      %v229 = vpack.c.b16 %v228, %v227
      %v235 = vunpack.c.l.b16 %v213
      %v236 = vunpack.c.l.b16 %v214
      %v237 = vunpack.c.l.b16 %v215
      %v238 = vunpack.c.l.b16 %v216
      %v239 = vunpack.c.l.b16 %v217
      %v240 = vpack.c.b16 %v236, %v235
      %v241 = vpack.c.b16 %v238, %v237
      %v242 = vpack.c.b16 %v239, %v239
      %vm245 = vcmask 293888
      %v247 = vsel %vm245, %v229, 0
      %vm249 = vcmask 1041408
      %v251 = vsel %vm249, %v242, 0
      %253 = vmatprep.subr.bf16.mxu0 0
      %254 = vmatpush1.bf16.msra.mxu0 %v240
      %255 = vmatprep.subr.bf16.mxu0 0
      %256 = vmatpush1.bf16.msra.mxu0 %v241
      %257 = vmatprep.subr.bf16.mxu0 0
      %258 = vmatpush1.bf16.msra.mxu0 %v251
      %259 = vmatprep.subr.bf16.mxu0 0
      %260 = vmatpush1.bf16.msra.mxu0 0
      %261 = vmatprep.subr.bf16.mxu0 0
      %262 = vmatpush1.bf16.msra.mxu0 0
      %263 = vmatprep.subr.bf16.mxu0 0
      %264 = vmatpush1.bf16.msra.mxu0 0
      %265 = vmatprep.subr.bf16.mxu0 0
      %266 = vmatpush1.bf16.msra.mxu0 0
      %267 = vmatprep.subr.bf16.mxu0 0
      %268 = vmatpush1.bf16.msra.mxu0 0
      %269 = vmatprep.subr.bf16.mxu0 0
      %270 = vmatpush1.bf16.msra.mxu0 0
      %271 = vmatprep.subr.bf16.mxu0 0
      %272 = vmatpush1.bf16.msra.mxu0 0
      %273 = vmatprep.subr.bf16.mxu0 0
      %274 = vmatpush1.bf16.msra.mxu0 0
      %275 = vmatprep.subr.bf16.mxu0 0
      %276 = vmatpush1.bf16.msra.mxu0 0
      %277 = vmatprep.subr.bf16.mxu0 0
      %278 = vmatpush1.bf16.msra.mxu0 0
      %279 = vmatprep.subr.bf16.mxu0 0
      %280 = vmatpush1.bf16.msra.mxu0 0
      %281 = vmatprep.subr.bf16.mxu0 0
      %282 = vmatpush1.bf16.msra.mxu0 0
      %283 = vmatprep.subr.bf16.mxu0 0
      %284 = vmatpush1.bf16.msra.mxu0 0
      %285 = vmatprep.mubr.bf16.mxu0 0
      %286 = vmatmul.mubr.bf16.gmra.mrb[0].mxu0 %v247
      %v287 = vpop.f32.mrb[0].mxu0
      %v288 = vadd.f32 %v223, %v287
      %v289 = vpop.f32.mrb[0].mxu0
      %v290 = vpop.f32.mrb[0].mxu0
      %v291 = vadd.f32 %v223, %v290
      %v292 = vpop.f32.mrb[0].mxu0
      %293 = vdwg.mxu0
      %v294 = vmul.f32 %v288, 0.5
      %v295 = vmul.f32 %v291, 0.5
      %v296 = vmul.f32 %v288, 0.70710677
      %v297 = vmul.f32 %v291, 0.70710677
      %v298 = verf.f32.pop %v296
      %v299 = verf.f32.pop %v297
      %v300 = vadd.f32 %v298, 1.0
      %v301 = vadd.f32 %v299, 1.0
      %v302 = vmul.f32 %v294, %v300
      %v303 = vmul.f32 %v295, %v301
      %v304 = vpack.c.bf16 %v303, %v302
      %v306 = vunpack.c.l.b16 %v304
      %v307 = vunpack.c.h.b16 %v304
      %v308 = vpack.c.b16 %v306, %v306
      %v309 = vpack.c.b16 %v307, %v307
      %vm312 = vcmask 60416
      %313 = vst.msk [vmem:[%s208] sm:$0xf] %vm312, %v308
      %314 = vst.msk [vmem:[%s208 + $0x4] sm:$0xf] %vm312, %v309
      %s315 = smul.u32 2, %s19
      %p316 = scmp.lt.s32.totalorder %s18, 1
      %s317 = scalar_select %p316, %s18, 1
      %p318 = scmp.lt.s32.totalorder %s315, 1
      %s319 = scalar_select %p318, %s315, 1
      %s320 = smul.addr %s317, 2
      %s321 = sadd.s32 %s319, %s320
      %s322 = smul.addr %s321, 4
      %s323 = scalar_lea.vmem %s3, %s322
      // Predicated region
      $region33: #{tpu_custom_call.1} parent=31 // pred_check
        %p324 = pneg %p116
      $region34: #{tpu_custom_call.1} parent=31 // pred_check_branch
        %326 = sbr.rel (%p324) target = $region36
      $region35: #{tpu_custom_call.1} parent=31 // pred_region
        %s327 = smul.u32 2, %s19
      $region36: #{tpu_custom_call.1} parent=31 // pred_fallthru
        _
    $region32: #{tpu_custom_call.1} parent=5 // pred_fallthru
      _
    %p328 = scmp.le.s32.totalorder 2, %s9
    // Predicated region
    $region37: #{tpu_custom_call.1} parent=5 // pred_check
      %p329 = pneg %p328
    $region38: #{tpu_custom_call.1} parent=5 // pred_check_branch
      %331 = sbr.rel (%p329) target = $region40
    $region39: #{tpu_custom_call.1} parent=5 // pred_region
      %s332 = ssub.s32 %s9, 2
      // Predicated region
      $region41: #{tpu_custom_call.1} parent=39 // pred_check
        %p333 = pneg %p122
      $region42: #{tpu_custom_call.1} parent=39 // pred_check_branch
        %335 = sbr.rel (%p333) target = $region44
      $region43: #{tpu_custom_call.1} parent=39 // pred_region
        %s336 = smul.u32 2, %s21
        %p337 = scmp.lt.s32.totalorder %s20, 1
        %s338 = scalar_select %p337, %s20, 1
        %p339 = scmp.lt.s32.totalorder %s336, 1
        %s340 = scalar_select %p339, %s336, 1
        %s341 = smul.addr %s338, 2
        %s342 = sadd.s32 %s340, %s341
        %s343 = smul.addr %s342, 4
        %s344 = scalar_lea.vmem %s3, %s343
      $region44: #{tpu_custom_call.1} parent=39 // pred_fallthru
        _
    $region40: #{tpu_custom_call.1} parent=5 // pred_fallthru
      _
  $region6: #{tpu_custom_call.1} parent=0 // loop_footer
    %s13 = sadd.s32 1, %s9
  $region7: #{tpu_custom_call.1} parent=0 // loop_footer_branch
    %8 = sbr.rel target = $region3
  $region8: #{tpu_custom_call.1} parent=0 // loop_exit
    _

</llo_original>
